<compile_context>
chip_gen: v7x
topology: tpu7x:2x2x1
jax: 0.10.0
libtpu: 0.0.40
codegen_flags: <defaults>
</compile_context>

<pallas_src>
import functools

import jax
import jax.numpy as jnp
from jax.experimental import pallas as pl
from jax.experimental.pallas import tpu as pltpu


def _round_up(x: int, m: int) -> int:
    return ((x + m - 1) // m) * m


def _vmem_budget_bytes() -> int:
    """~75% of per-core VMEM capacity (96 MiB on v5e/v6e, 48 MiB on v7x)."""
    cap = 64 * 1024 * 1024  # conservative fallback (v7x-sized)
    try:
        info = pltpu.get_tpu_info()
        cap = int(getattr(info, "vmem_capacity_bytes", cap)) or cap
    except Exception:
        pass
    return int(0.75 * cap)


_VMEM_BUDGET = _vmem_budget_bytes()


def _resident_kernel(x_ref, w1_ref, b1_ref, w2_ref, b2_ref, o_ref, *,
                     compute_dtype):
    x = x_ref[...]
    if compute_dtype is not None:
        x = x.astype(compute_dtype)          # VPU cast, hidden under the MXU
    h = jnp.dot(x, w1_ref[...], preferred_element_type=jnp.float32)
    h = jnp.maximum(h + b1_ref[...], 0.0)    # b1 is f32; clamp(min=0)
    y = jnp.dot(h.astype(w2_ref.dtype), w2_ref[...],
                preferred_element_type=jnp.float32)
    o_ref[...] = (y + b2_ref[...]).astype(o_ref.dtype)


def _h_tiled_kernel(x_ref, w1_ref, b1_ref, w2_ref, b2_ref, o_ref, acc_ref, *,
                    compute_dtype):
    h_idx = pl.program_id(1)

    @pl.when(h_idx == 0)
    def _():
        acc_ref[...] = jnp.zeros_like(acc_ref)

    x = x_ref[...]
    if compute_dtype is not None:
        x = x.astype(compute_dtype)
    h = jnp.dot(x, w1_ref[...], preferred_element_type=jnp.float32)
    h = jnp.maximum(h + b1_ref[...], 0.0)    # ReLU is elementwise -> per-tile OK
    acc_ref[...] += jnp.dot(h.astype(w2_ref.dtype), w2_ref[...],
                            preferred_element_type=jnp.float32)

    @pl.when(h_idx == pl.num_programs(1) - 1)
    def _():
        o_ref[...] = (acc_ref[...] + b2_ref[...]).astype(o_ref.dtype)


def _two_layer_net_impl(x, w1, b1, w2, b2, *, tm=1024, th=None,
                        compute_dtype=None):
    """x: (N, D_in); w1: (D_in, H); b1: (H,)/(1,H); w2: (H, D_out);
    b2: (D_out,)/(1,D_out). Returns (N, D_out) in x.dtype."""
    N, D_in = x.shape
    H = w1.shape[1]
    D_out = w2.shape[1]
    out_dtype = x.dtype

    w_dtype = compute_dtype if compute_dtype is not None else w1.dtype
    w1 = w1.astype(w_dtype)
    w2 = w2.astype(w_dtype)
    b1 = b1.reshape(1, H).astype(jnp.float32)      # biases stay f32 end-to-end
    b2 = b2.reshape(1, D_out).astype(jnp.float32)

    # Lane-dense padded feature dims; batch only to a sublane multiple.
    D_in_p = _round_up(D_in, 128)
    H_p = _round_up(H, 128)
    D_out_p = _round_up(D_out, 128)
    N_p = _round_up(N, 8)

    x_item = jnp.dtype(x.dtype).itemsize
    w_item = jnp.dtype(w_dtype).itemsize
    o_item = jnp.dtype(out_dtype).itemsize
    c_item = (jnp.dtype(compute_dtype).itemsize
              if compute_dtype is not None else x_item)

    budget = _VMEM_BUDGET
    usable = int(0.85 * budget)   # headroom for compiler temps

    tm = max(8, _round_up(tm, 8))
    # Aim for >= 2 batch tiles so v7x megacore can split the "parallel" axis.
    tm_two_tiles = _round_up(pl.cdiv(N_p, 2), 8)

    # --- resident-weights path feasibility & budget-derived TM ---------------
    resident_bytes = (2 * (D_in_p * H_p + H_p * D_out_p) * w_item  # dbl-buffered
                      + 2 * (H_p + D_out_p) * 4)                   # f32 biases
    per_row = (2 * D_in_p * x_item        # x stream (double buffered)
               + 2 * D_out_p * o_item     # out stream (double buffered)
               + D_in_p * c_item          # in-kernel cast copy of x
               + H_p * (4 + w_item)       # f32 hidden + cast for 2nd matmul
               + D_out_p * 4)             # f32 y before output cast
    avail = usable - resident_bytes
    tm_budget = (avail // per_row) // 8 * 8 if avail > 0 else 0
    use_resident = (th is None) and (tm_budget >= 8)

    flops = 2 * N_p * D_in_p * H_p + 2 * N_p * H_p * D_out_p

    if use_resident:
        TM = min(tm, tm_two_tiles, tm_budget, N_p)
        n_m = pl.cdiv(N_p, TM)

        # Zero padding preserves the math (zero weight rows/cols, zero bias).
        x_p = jnp.zeros((N_p, D_in_p), x.dtype).at[:N, :D_in].set(x)
        w1_p = jnp.zeros((D_in_p, H_p), w_dtype).at[:D_in, :H].set(w1)
        b1_p = jnp.zeros((1, H_p), jnp.float32).at[:, :H].set(b1)
        w2_p = jnp.zeros((H_p, D_out_p), w_dtype).at[:H, :D_out].set(w2)
        b2_p = jnp.zeros((1, D_out_p), jnp.float32).at[:, :D_out].set(b2)

        bytes_accessed = (N_p * D_in_p * x_item
                          + (D_in_p * H_p + H_p * D_out_p) * w_item
                          + (H_p + D_out_p) * 4
                          + N_p * D_out_p * o_item)
        cost = pl.CostEstimate(flops=int(flops), transcendentals=0,
                               bytes_accessed=int(bytes_accessed))

        y_p = pl.pallas_call(
            functools.partial(_resident_kernel, compute_dtype=compute_dtype),
            out_shape=jax.ShapeDtypeStruct((N_p, D_out_p), out_dtype),
            grid_spec=pltpu.PrefetchScalarGridSpec(
                num_scalar_prefetch=0,
                grid=(n_m,),
                in_specs=[
                    # x streams tile-by-tile over the batch axis.
                    pl.BlockSpec((TM, D_in_p), lambda i: (i, 0)),
                    # Weights / biases stay VMEM-resident across the grid.
                    pl.BlockSpec((D_in_p, H_p), lambda i: (0, 0)),
                    pl.BlockSpec((1, H_p), lambda i: (0, 0)),
                    pl.BlockSpec((H_p, D_out_p), lambda i: (0, 0)),
                    pl.BlockSpec((1, D_out_p), lambda i: (0, 0)),
                ],
                out_specs=pl.BlockSpec((TM, D_out_p), lambda i: (i, 0)),
            ),
            compiler_params=pltpu.CompilerParams(
                dimension_semantics=("parallel",),
                vmem_limit_bytes=budget,
            ),
            cost_estimate=cost,
        )(x_p, w1_p, b1_p, w2_p, b2_p)
    else:
        # --- H-tiled fallback: weights streamed in hidden-dim tiles ----------
        if th is not None:
            TH = min(_round_up(th, 128), H_p)
        else:
            TH = 128
        TM = min(tm, tm_two_tiles, N_p, 512)

        def tiled_bytes(tm_, th_):
            return (2 * tm_ * D_in_p * x_item
                    + 2 * tm_ * D_out_p * o_item
                    + tm_ * D_out_p * 4                          # accumulator
                    + 2 * (D_in_p * th_ + th_ * D_out_p) * w_item
                    + 2 * th_ * 4 + 2 * D_out_p * 4
                    + tm_ * D_in_p * c_item
                    + tm_ * th_ * (4 + w_item))

        while TM > 8 and tiled_bytes(TM, TH) > usable:
            TM = max(8, (TM // 2) // 8 * 8)
        if th is None:
            while TH * 2 <= H_p and tiled_bytes(TM, TH * 2) <= usable:
                TH *= 2

        # Pad H to an exact multiple of TH: the contraction axis must never see
        # out-of-bounds garbage (zero padding keeps the math exact).
        H_pad = _round_up(H_p, TH)
        n_m = pl.cdiv(N_p, TM)
        n_h = H_pad // TH

        x_p = jnp.zeros((N_p, D_in_p), x.dtype).at[:N, :D_in].set(x)
        w1_p = jnp.zeros((D_in_p, H_pad), w_dtype).at[:D_in, :H].set(w1)
        b1_p = jnp.zeros((1, H_pad), jnp.float32).at[:, :H].set(b1)
        w2_p = jnp.zeros((H_pad, D_out_p), w_dtype).at[:H, :D_out].set(w2)
        b2_p = jnp.zeros((1, D_out_p), jnp.float32).at[:, :D_out].set(b2)

        bytes_accessed = (N_p * D_in_p * x_item
                          + n_m * (D_in_p * H_pad + H_pad * D_out_p) * w_item
                          + (H_pad + D_out_p) * 4
                          + N_p * D_out_p * o_item)
        cost = pl.CostEstimate(flops=int(flops), transcendentals=0,
                               bytes_accessed=int(bytes_accessed))

        y_p = pl.pallas_call(
            functools.partial(_h_tiled_kernel, compute_dtype=compute_dtype),
            out_shape=jax.ShapeDtypeStruct((N_p, D_out_p), out_dtype),
            grid_spec=pltpu.PrefetchScalarGridSpec(
                num_scalar_prefetch=0,
                grid=(n_m, n_h),
                in_specs=[
                    pl.BlockSpec((TM, D_in_p), lambda i, h: (i, 0)),
                    pl.BlockSpec((D_in_p, TH), lambda i, h: (0, h)),
                    pl.BlockSpec((1, TH), lambda i, h: (0, h)),
                    pl.BlockSpec((TH, D_out_p), lambda i, h: (h, 0)),
                    pl.BlockSpec((1, D_out_p), lambda i, h: (0, 0)),
                ],
                out_specs=pl.BlockSpec((TM, D_out_p), lambda i, h: (i, 0)),
                scratch_shapes=[pltpu.VMEM((TM, D_out_p), jnp.float32)],
            ),
            compiler_params=pltpu.CompilerParams(
                dimension_semantics=("parallel", "arbitrary"),
                vmem_limit_bytes=budget,
            ),
            cost_estimate=cost,
        )(x_p, w1_p, b1_p, w2_p, b2_p)

    # Strip the padding.
    return y_p[:N, :D_out]


two_layer_net = jax.jit(_two_layer_net_impl,
                        static_argnames=("tm", "th", "compute_dtype"))


if __name__ == "__main__":
    # Small shapes consistent with TwoLayerNet(D_in, H, D_out) on x: (N, D_in)
    N, D_in, H, D_out = 8, 32, 64, 16

    keys = jax.random.split(jax.random.PRNGKey(0), 8)
    x = jax.random.normal(keys[0], (N, D_in), dtype=jnp.float32)
    # PyTorch Linear weights are (H, D_in) / (D_out, H); stored transposed here
    # for the x @ W convention.
    w1 = jax.random.normal(keys[1], (D_in, H), dtype=jnp.float32) * 0.1
    b1 = jax.random.normal(keys[2], (H,), dtype=jnp.float32) * 0.1
    w2 = jax.random.normal(keys[3], (H, D_out), dtype=jnp.float32) * 0.1
    b2 = jax.random.normal(keys[4], (D_out,), dtype=jnp.float32) * 0.1

    ref = jnp.maximum(x @ w1 + b1, 0.0) @ w2 + b2

    # 1) f32 resident-weights path (tight tolerance).
    y = two_layer_net(x, w1, b1, w2, b2)
    jax.block_until_ready(y)
    assert y.shape == (N, D_out)
    assert jnp.allclose(y, ref, atol=1e-5, rtol=1e-5)

    # 2) bf16 MXU-operand path (f32 accumulation, f32 biases) — looser tol.
    y_bf16 = two_layer_net(x, w1, b1, w2, b2, compute_dtype=jnp.bfloat16)
    jax.block_until_ready(y_bf16)
    assert jnp.allclose(y_bf16, ref, atol=5e-2, rtol=5e-2)

    # 3) Forced H-tiled fallback path (as used when weights outgrow VMEM).
    H2 = 256
    w1b = jax.random.normal(keys[5], (D_in, H2), dtype=jnp.float32) * 0.1
    b1b = jax.random.normal(keys[6], (H2,), dtype=jnp.float32) * 0.1
    w2b = jax.random.normal(keys[7], (H2, D_out), dtype=jnp.float32) * 0.1
    refb = jnp.maximum(x @ w1b + b1b, 0.0) @ w2b + b2
    yb = two_layer_net(x, w1b, b1b, w2b, b2, th=128)
    jax.block_until_ready(yb)
    assert jnp.allclose(yb, refb, atol=1e-5, rtol=1e-5)

    print("KERNEL_OK")
</pallas_src>

<mosaic_0001>
module attributes {stable_mosaic.version = 11 : i64} {
  func.func @_resident_kernel(%arg0: i32, %arg1: memref<8x128xf32, #tpu.memory_space<vmem>>, %arg2: memref<128x128xf32, #tpu.memory_space<vmem>>, %arg3: memref<1x128xf32, #tpu.memory_space<vmem>>, %arg4: memref<128x128xf32, #tpu.memory_space<vmem>>, %arg5: memref<1x128xf32, #tpu.memory_space<vmem>>, %arg6: memref<8x128xf32, #tpu.memory_space<vmem>>) attributes {dimension_semantics = [#tpu.dimension_semantics<parallel>], iteration_bounds = array<i64: 1>, scalar_prefetch = 0 : i64, scratch_operands = 0 : i64, tpu.core_type = #tpu.core_type<tc>, window_params = [{transform_indices = @transform_0, window_bounds = array<i64: 8, 128>}, {pipeline_mode = #tpu.pipeline_mode<synchronous>, transform_indices = @transform_1, window_bounds = array<i64: 128, 128>}, {pipeline_mode = #tpu.pipeline_mode<synchronous>, transform_indices = @transform_2, window_bounds = array<i64: 1, 128>}, {pipeline_mode = #tpu.pipeline_mode<synchronous>, transform_indices = @transform_3, window_bounds = array<i64: 128, 128>}, {pipeline_mode = #tpu.pipeline_mode<synchronous>, transform_indices = @transform_4, window_bounds = array<i64: 1, 128>}, {transform_indices = @transform_5, window_bounds = array<i64: 8, 128>}]} {
    %c0 = arith.constant 0 : index
    %c0_0 = arith.constant 0 : index
    %0 = vector.load %arg1[%c0, %c0_0] : memref<8x128xf32, #tpu.memory_space<vmem>>, vector<8x128xf32>
    %c0_1 = arith.constant 0 : index
    %c0_2 = arith.constant 0 : index
    %1 = vector.load %arg2[%c0_1, %c0_2] : memref<128x128xf32, #tpu.memory_space<vmem>>, vector<128x128xf32>
    %cst = arith.constant dense<0.000000e+00> : vector<8x128xf32>
    %2 = tpu.matmul %0, %1, %cst {dimension_numbers = #tpu.dot_dimension_numbers<[1], [0], [0], [1], [0, 0, 1, 1], [], []>} : vector<8x128xf32>, vector<128x128xf32>, vector<8x128xf32> -> vector<8x128xf32>
    %c0_3 = arith.constant 0 : index
    %c0_4 = arith.constant 0 : index
    %3 = vector.load %arg3[%c0_3, %c0_4] : memref<1x128xf32, #tpu.memory_space<vmem>>, vector<1x128xf32>
    %4 = vector.broadcast %3 : vector<1x128xf32> to vector<8x128xf32>
    %5 = arith.addf %2, %4 : vector<8x128xf32>
    %cst_5 = arith.constant 0.000000e+00 : f32
    %6 = vector.broadcast %cst_5 : f32 to vector<8x128xf32>
    %7 = arith.maximumf %5, %6 : vector<8x128xf32>
    %c0_6 = arith.constant 0 : index
    %c0_7 = arith.constant 0 : index
    %8 = vector.load %arg4[%c0_6, %c0_7] : memref<128x128xf32, #tpu.memory_space<vmem>>, vector<128x128xf32>
    %cst_8 = arith.constant dense<0.000000e+00> : vector<8x128xf32>
    %9 = tpu.matmul %7, %8, %cst_8 {dimension_numbers = #tpu.dot_dimension_numbers<[1], [0], [0], [1], [0, 0, 1, 1], [], []>} : vector<8x128xf32>, vector<128x128xf32>, vector<8x128xf32> -> vector<8x128xf32>
    %c0_9 = arith.constant 0 : index
    %c0_10 = arith.constant 0 : index
    %10 = vector.load %arg5[%c0_9, %c0_10] : memref<1x128xf32, #tpu.memory_space<vmem>>, vector<1x128xf32>
    %11 = vector.broadcast %10 : vector<1x128xf32> to vector<8x128xf32>
    %12 = arith.addf %9, %11 : vector<8x128xf32>
    %c0_11 = arith.constant 0 : index
    %c0_12 = arith.constant 0 : index
    %13 = vector.load %arg6[%c0_11, %c0_12] : memref<8x128xf32, #tpu.memory_space<vmem>>, vector<8x128xf32>
    tpu.vector_store %arg6[%c0_11, %c0_12], %12 {strides = array<i32>} : memref<8x128xf32, #tpu.memory_space<vmem>>, vector<8x128xf32>,
    return
  }
  func.func @transform_0(%arg0: i32) -> (i32, i32) {
    %c0_i32 = arith.constant 0 : i32
    %c0_i32_0 = arith.constant 0 : i32
    return %arg0, %c0_i32 : i32, i32
  }
  func.func @transform_1(%arg0: i32) -> (i32, i32) {
    %c0_i32 = arith.constant 0 : i32
    %c0_i32_0 = arith.constant 0 : i32
    %c0_i32_1 = arith.constant 0 : i32
    return %c0_i32, %c0_i32_0 : i32, i32
  }
  func.func @transform_2(%arg0: i32) -> (i32, i32) {
    %c0_i32 = arith.constant 0 : i32
    %c0_i32_0 = arith.constant 0 : i32
    %c0_i32_1 = arith.constant 0 : i32
    return %c0_i32, %c0_i32_0 : i32, i32
  }
  func.func @transform_3(%arg0: i32) -> (i32, i32) {
    %c0_i32 = arith.constant 0 : i32
    %c0_i32_0 = arith.constant 0 : i32
    %c0_i32_1 = arith.constant 0 : i32
    return %c0_i32, %c0_i32_0 : i32, i32
  }
  func.func @transform_4(%arg0: i32) -> (i32, i32) {
    %c0_i32 = arith.constant 0 : i32
    %c0_i32_0 = arith.constant 0 : i32
    %c0_i32_1 = arith.constant 0 : i32
    return %c0_i32, %c0_i32_0 : i32, i32
  }
  func.func @transform_5(%arg0: i32) -> (i32, i32) {
    %c0_i32 = arith.constant 0 : i32
    %c0_i32_0 = arith.constant 0 : i32
    return %arg0, %c0_i32 : i32, i32
  }
}

</mosaic_0001>

<llo_original>
// kernel: _two_layer_net_impl.1
$region0: #{_two_layer_net_impl.1}
  #allocation0 [shape = 'u32[]', space=smem, size = 0x4, offset = 0x4, fixed_abs, tag = 'smem constant byte address 0x4 - core index']
  #allocation1 [shape = 'u32[144,128]{1,0:T(1,128)}', space=vmem, size = 0x12000, scoped, tag = 'internal scratch']
  %s0 = inlined_call_operand.vmem [shape: f32[8,128], index: 0, kind: input, shape index: {}]
  %s1 = inlined_call_operand.vmem [shape: f32[128,128], index: 1, kind: input, shape index: {}]
  %s2 = inlined_call_operand.vmem [shape: f32[1,128], index: 2, kind: input, shape index: {}]
  %s3 = inlined_call_operand.vmem [shape: f32[128,128], index: 3, kind: input, shape index: {}]
  %s4 = inlined_call_operand.vmem [shape: f32[1,128], index: 4, kind: input, shape index: {}]
  %s5 = inlined_call_operand.hbm [shape: f32[8,128], index: 5, kind: output, shape index: {}]
  %s6 = sld [smem:[#allocation0]]
  $region30: #{_two_layer_net_impl.1} parent=0
    _
  %s8 = ssub.s32 1, %s6
  %s9 = scalar_select 0, %s8, %s6
  $region1: #{_two_layer_net_impl.1} parent=0
    #allocation2 [shape = 'u8[4096]{0}', space=vmem, size = 0x1000, scoped, tag = 'output window, operand 0, single buffered']
    #allocation3 [shape = 's32[1]{0}', space=sflag, size = 0x4, scoped, tag = 'scoped memory for _two_layer_net_impl.1']
    %10 = vsyncpa [#allocation3], 0
    // Predicated region
    $region2: #{_two_layer_net_impl.1} parent=1 // pred_check
      _
    $region3: #{_two_layer_net_impl.1} parent=1 // pred_check_branch
      %12 = sbr.rel (0) target = $region5
    $region4: #{_two_layer_net_impl.1} parent=1 // pred_region
      _
    $region5: #{_two_layer_net_impl.1} parent=1 // pred_fallthru
      _
    // Predicated region
    $region6: #{_two_layer_net_impl.1} parent=1 // pred_check
      _
    $region7: #{_two_layer_net_impl.1} parent=1 // pred_check_branch
      %14 = sbr.rel (0) target = $region9
    $region8: #{_two_layer_net_impl.1} parent=1 // pred_region
      _
    $region9: #{_two_layer_net_impl.1} parent=1 // pred_fallthru
      _
    // Predicated region
    $region10: #{_two_layer_net_impl.1} parent=1 // pred_check
      _
    $region11: #{_two_layer_net_impl.1} parent=1 // pred_check_branch
      %16 = sbr.rel (0) target = $region13
    $region12: #{_two_layer_net_impl.1} parent=1 // pred_region
      _
    $region13: #{_two_layer_net_impl.1} parent=1 // pred_fallthru
      _
    // Predicated region
    $region14: #{_two_layer_net_impl.1} parent=1 // pred_check
      _
    $region15: #{_two_layer_net_impl.1} parent=1 // pred_check_branch
      %18 = sbr.rel (0) target = $region17
    $region16: #{_two_layer_net_impl.1} parent=1 // pred_region
      _
    $region17: #{_two_layer_net_impl.1} parent=1 // pred_fallthru
      _
    // Predicated region
    $region18: #{_two_layer_net_impl.1} parent=1 // pred_check
      _
    $region19: #{_two_layer_net_impl.1} parent=1 // pred_check_branch
      %20 = sbr.rel (0) target = $region21
    $region20: #{_two_layer_net_impl.1} parent=1 // pred_region
      _
    $region21: #{_two_layer_net_impl.1} parent=1 // pred_fallthru
      _
    %v21 = vld [vmem:[%s0] sm:$0xff]
    %v22 = vld [vmem:[%s1] sm:$0xff]
    %v23 = vld [vmem:[%s1 + $0x8] sm:$0xff]
    %v24 = vld [vmem:[%s1 + $0x10] sm:$0xff]
    %v25 = vld [vmem:[%s1 + $0x18] sm:$0xff]
    %v26 = vld [vmem:[%s1 + $0x20] sm:$0xff]
    %v27 = vld [vmem:[%s1 + $0x28] sm:$0xff]
    %v28 = vld [vmem:[%s1 + $0x30] sm:$0xff]
    %v29 = vld [vmem:[%s1 + $0x38] sm:$0xff]
    %v30 = vld [vmem:[%s1 + $0x40] sm:$0xff]
    %v31 = vld [vmem:[%s1 + $0x48] sm:$0xff]
    %v32 = vld [vmem:[%s1 + $0x50] sm:$0xff]
    %v33 = vld [vmem:[%s1 + $0x58] sm:$0xff]
    %v34 = vld [vmem:[%s1 + $0x60] sm:$0xff]
    %v35 = vld [vmem:[%s1 + $0x68] sm:$0xff]
    %v36 = vld [vmem:[%s1 + $0x70] sm:$0xff]
    %v37 = vld [vmem:[%s1 + $0x78] sm:$0xff]
    %v38 = vld [vmem:[%s2] sm:$0x1]
    %v40 = vlaneseq
    %v41 = vshrl.u32 %v40, 7
    %v42 = vsub.s32 0, %v41
    %v43 = vrot.slane %v38, %v42
    %45 = vmatprep.subr.mxu0 0.0
    %46 = vmatpush1.msra.mxu0 %v22
    %47 = vmatprep.subr.mxu0 0.0
    %48 = vmatpush1.msra.mxu0 %v23
    %49 = vmatprep.subr.mxu0 0.0
    %50 = vmatpush1.msra.mxu0 %v24
    %51 = vmatprep.subr.mxu0 0.0
    %52 = vmatpush1.msra.mxu0 %v25
    %53 = vmatprep.subr.mxu0 0.0
    %54 = vmatpush1.msra.mxu0 %v26
    %55 = vmatprep.subr.mxu0 0.0
    %56 = vmatpush1.msra.mxu0 %v27
    %57 = vmatprep.subr.mxu0 0.0
    %58 = vmatpush1.msra.mxu0 %v28
    %59 = vmatprep.subr.mxu0 0.0
    %60 = vmatpush1.msra.mxu0 %v29
    %61 = vmatprep.subr.mxu0 0.0
    %62 = vmatpush1.msra.mxu0 %v30
    %63 = vmatprep.subr.mxu0 0.0
    %64 = vmatpush1.msra.mxu0 %v31
    %65 = vmatprep.subr.mxu0 0.0
    %66 = vmatpush1.msra.mxu0 %v32
    %67 = vmatprep.subr.mxu0 0.0
    %68 = vmatpush1.msra.mxu0 %v33
    %69 = vmatprep.subr.mxu0 0.0
    %70 = vmatpush1.msra.mxu0 %v34
    %71 = vmatprep.subr.mxu0 0.0
    %72 = vmatpush1.msra.mxu0 %v35
    %73 = vmatprep.subr.mxu0 0.0
    %74 = vmatpush1.msra.mxu0 %v36
    %75 = vmatprep.subr.mxu0 0.0
    %76 = vmatpush1.msra.mxu0 %v37
    %77 = vmatprep.subr.mxu0 0.0
    %78 = vmatpush1.msra.mxu0 0.0
    %79 = vmatprep.subr.mxu0 0.0
    %80 = vmatpush1.msra.mxu0 0.0
    %81 = vmatprep.subr.mxu0 0.0
    %82 = vmatpush1.msra.mxu0 0.0
    %83 = vmatprep.subr.mxu0 0.0
    %84 = vmatpush1.msra.mxu0 0.0
    %85 = vmatprep.subr.mxu0 0.0
    %86 = vmatpush1.msra.mxu0 0.0
    %87 = vmatprep.subr.mxu0 0.0
    %88 = vmatpush1.msra.mxu0 0.0
    %89 = vmatprep.subr.mxu0 0.0
    %90 = vmatpush1.msra.mxu0 0.0
    %91 = vmatprep.subr.mxu0 0.0
    %92 = vmatpush1.msra.mxu0 0.0
    %93 = vmatprep.subr.mxu0 0.0
    %94 = vmatpush1.msra.mxu0 0.0
    %95 = vmatprep.subr.mxu0 0.0
    %96 = vmatpush1.msra.mxu0 0.0
    %97 = vmatprep.subr.mxu0 0.0
    %98 = vmatpush1.msra.mxu0 0.0
    %99 = vmatprep.subr.mxu0 0.0
    %100 = vmatpush1.msra.mxu0 0.0
    %101 = vmatprep.subr.mxu0 0.0
    %102 = vmatpush1.msra.mxu0 0.0
    %103 = vmatprep.subr.mxu0 0.0
    %104 = vmatpush1.msra.mxu0 0.0
    %105 = vmatprep.subr.mxu0 0.0
    %106 = vmatpush1.msra.mxu0 0.0
    %107 = vmatprep.subr.mxu0 0.0
    %108 = vmatpush1.msra.mxu0 0.0
    %109 = vmatprep.mubr.f32.mxu0 0.0
    %110 = vmatmul.mubr.f32.gmra.mrb[0].mxu0 %v21
    %v111 = vpop.f32.mrb[0].mxu0
    %v112 = vadd.f32 %v43, %v111
    %v113 = vpop.f32.mrb[0].mxu0
    %114 = vdwg.mxu0
    %v115 = vmax.f32 %v112, 0.0
    %v116 = vld [vmem:[%s3] sm:$0xff]
    %v117 = vld [vmem:[%s3 + $0x8] sm:$0xff]
    %v118 = vld [vmem:[%s3 + $0x10] sm:$0xff]
    %v119 = vld [vmem:[%s3 + $0x18] sm:$0xff]
    %v120 = vld [vmem:[%s3 + $0x20] sm:$0xff]
    %v121 = vld [vmem:[%s3 + $0x28] sm:$0xff]
    %v122 = vld [vmem:[%s3 + $0x30] sm:$0xff]
    %v123 = vld [vmem:[%s3 + $0x38] sm:$0xff]
    %v124 = vld [vmem:[%s3 + $0x40] sm:$0xff]
    %v125 = vld [vmem:[%s3 + $0x48] sm:$0xff]
    %v126 = vld [vmem:[%s3 + $0x50] sm:$0xff]
    %v127 = vld [vmem:[%s3 + $0x58] sm:$0xff]
    %v128 = vld [vmem:[%s3 + $0x60] sm:$0xff]
    %v129 = vld [vmem:[%s3 + $0x68] sm:$0xff]
    %v130 = vld [vmem:[%s3 + $0x70] sm:$0xff]
    %v131 = vld [vmem:[%s3 + $0x78] sm:$0xff]
    %v132 = vld [vmem:[%s4] sm:$0x1]
    %v134 = vlaneseq
    %v135 = vshrl.u32 %v134, 7
    %v136 = vsub.s32 0, %v135
    %v137 = vrot.slane %v132, %v136
    %139 = vmatprep.subr.mxu0 0.0
    %140 = vmatpush1.msra.mxu0 %v116
    %141 = vmatprep.subr.mxu0 0.0
    %142 = vmatpush1.msra.mxu0 %v117
    %143 = vmatprep.subr.mxu0 0.0
    %144 = vmatpush1.msra.mxu0 %v118
    %145 = vmatprep.subr.mxu0 0.0
    %146 = vmatpush1.msra.mxu0 %v119
    %147 = vmatprep.subr.mxu0 0.0
    %148 = vmatpush1.msra.mxu0 %v120
    %149 = vmatprep.subr.mxu0 0.0
    %150 = vmatpush1.msra.mxu0 %v121
    %151 = vmatprep.subr.mxu0 0.0
    %152 = vmatpush1.msra.mxu0 %v122
    %153 = vmatprep.subr.mxu0 0.0
    %154 = vmatpush1.msra.mxu0 %v123
    %155 = vmatprep.subr.mxu0 0.0
    %156 = vmatpush1.msra.mxu0 %v124
    %157 = vmatprep.subr.mxu0 0.0
    %158 = vmatpush1.msra.mxu0 %v125
    %159 = vmatprep.subr.mxu0 0.0
    %160 = vmatpush1.msra.mxu0 %v126
    %161 = vmatprep.subr.mxu0 0.0
    %162 = vmatpush1.msra.mxu0 %v127
    %163 = vmatprep.subr.mxu0 0.0
    %164 = vmatpush1.msra.mxu0 %v128
    %165 = vmatprep.subr.mxu0 0.0
    %166 = vmatpush1.msra.mxu0 %v129
    %167 = vmatprep.subr.mxu0 0.0
    %168 = vmatpush1.msra.mxu0 %v130
    %169 = vmatprep.subr.mxu0 0.0
    %170 = vmatpush1.msra.mxu0 %v131
    %171 = vmatprep.subr.mxu0 0.0
    %172 = vmatpush1.msra.mxu0 0.0
    %173 = vmatprep.subr.mxu0 0.0
    %174 = vmatpush1.msra.mxu0 0.0
    %175 = vmatprep.subr.mxu0 0.0
    %176 = vmatpush1.msra.mxu0 0.0
    %177 = vmatprep.subr.mxu0 0.0
    %178 = vmatpush1.msra.mxu0 0.0
    %179 = vmatprep.subr.mxu0 0.0
    %180 = vmatpush1.msra.mxu0 0.0
    %181 = vmatprep.subr.mxu0 0.0
    %182 = vmatpush1.msra.mxu0 0.0
    %183 = vmatprep.subr.mxu0 0.0
    %184 = vmatpush1.msra.mxu0 0.0
    %185 = vmatprep.subr.mxu0 0.0
    %186 = vmatpush1.msra.mxu0 0.0
    %187 = vmatprep.subr.mxu0 0.0
    %188 = vmatpush1.msra.mxu0 0.0
    %189 = vmatprep.subr.mxu0 0.0
    %190 = vmatpush1.msra.mxu0 0.0
    %191 = vmatprep.subr.mxu0 0.0
    %192 = vmatpush1.msra.mxu0 0.0
    %193 = vmatprep.subr.mxu0 0.0
    %194 = vmatpush1.msra.mxu0 0.0
    %195 = vmatprep.subr.mxu0 0.0
    %196 = vmatpush1.msra.mxu0 0.0
    %197 = vmatprep.subr.mxu0 0.0
    %198 = vmatpush1.msra.mxu0 0.0
    %199 = vmatprep.subr.mxu0 0.0
    %200 = vmatpush1.msra.mxu0 0.0
    %201 = vmatprep.subr.mxu0 0.0
    %202 = vmatpush1.msra.mxu0 0.0
    %203 = vmatprep.mubr.f32.mxu0 0.0
    %204 = vmatmul.mubr.f32.gmra.mrb[0].mxu0 %v115
    %v205 = vpop.f32.mrb[0].mxu0
    %v206 = vadd.f32 %v137, %v205
    %v207 = vpop.f32.mrb[0].mxu0
    %208 = vdwg.mxu0
    %209 = vst [vmem:[#allocation2] sm:$0xff] %v206
    // Predicated region
    $region22: #{_two_layer_net_impl.1} parent=1 // pred_check
      _
    $region23: #{_two_layer_net_impl.1} parent=1 // pred_check_branch
      %211 = sbr.rel (0) target = $region25
    $region24: #{_two_layer_net_impl.1} parent=1 // pred_region
      %s213 = ssub.s32 128, 128
      %214 = vsyncadd [#allocation3], %s213
      %s216 = sshll.u32 [#allocation2], 4
      %s217 = int_to_ptr.vmem [resolvable:$true] %s216
      %219 = dma.vmem_to_hbm [thread:$0]  %s217, 128, %s5, [#allocation3]
    $region25: #{_two_layer_net_impl.1} parent=1 // pred_fallthru
      _
    // Predicated region
    $region26: #{_two_layer_net_impl.1} parent=1 // pred_check
      _
    $region27: #{_two_layer_net_impl.1} parent=1 // pred_check_branch
      %221 = sbr.rel (0) target = $region29
    $region28: #{_two_layer_net_impl.1} parent=1 // pred_region
      %222 = dma.done [#allocation3], 128
    $region29: #{_two_layer_net_impl.1} parent=1 // pred_fallthru
      _
    %223 = vsyncpa [#allocation3], 1

</llo_original>
